<compile_context>
chip_gen: v6e
topology: v6e:2x2x1
jax: 0.10.0
libtpu: 0.0.40
codegen_flags: <defaults>
</compile_context>

<pallas_src>
import jax
import jax.numpy as jnp
from jax.experimental import pallas as pl
from jax.experimental.pallas import tpu as pltpu

_SUBLANE = 16  # sublane multiple for batch tiles (bf16-safe; also fine for f32)


def _round_up(n, m):
    return ((n + m - 1) // m) * m


def _cdiv(a, b):
    return (a + b - 1) // b


def _pick_tile(batch, block_rows, min_steps=2):
    """Pick (tile_rows, grid) for the batch axis.

    * tile is a multiple of _SUBLANE (or == batch when batch <= _SUBLANE,
      which is legal because block dim == full array dim).
    * grid = cdiv(batch, tile): the partial tail tile is masked by Pallas, so
      padding waste is bounded by < one tile for any batch size.
    * tile is capped so the grid has >= min_steps steps whenever possible
      (v7x dual-TC sharding via dimension_semantics=("parallel",)).
    """
    if batch > _SUBLANE:
        tm = _round_up(_cdiv(batch, min_steps), _SUBLANE)
        tm = min(tm, _round_up(block_rows, _SUBLANE))
        tm = max(tm, _SUBLANE)
    else:
        tm = batch
    return tm, _cdiv(batch, tm)


def _mlp(x, w1_ref, b1_ref, w2_ref, b2_ref):
    # Hidden layer: ReLU(x @ W1 + b1), f32 accumulation on the MXU.
    h = jnp.dot(x, w1_ref[...], preferred_element_type=jnp.float32)
    h = jnp.maximum(h + b1_ref[...].astype(jnp.float32), 0.0)
    # Output layer: ReLU(h @ W2 + b2)
    y = jnp.dot(h.astype(w2_ref.dtype), w2_ref[...],
                preferred_element_type=jnp.float32)
    return jnp.maximum(y + b2_ref[...].astype(jnp.float32), 0.0)


def _embed_kernel(x_ref, w1_ref, b1_ref, w2_ref, b2_ref, o_ref):
    o_ref[...] = _mlp(x_ref[...], w1_ref, b1_ref, w2_ref, b2_ref).astype(o_ref.dtype)


def _triplet_kernel(xa_ref, xp_ref, xn_ref, w1_ref, b1_ref, w2_ref, b2_ref,
                    oa_ref, op_ref, on_ref):
    oa_ref[...] = _mlp(xa_ref[...], w1_ref, b1_ref, w2_ref, b2_ref).astype(oa_ref.dtype)
    op_ref[...] = _mlp(xp_ref[...], w1_ref, b1_ref, w2_ref, b2_ref).astype(op_ref.dtype)
    on_ref[...] = _mlp(xn_ref[...], w1_ref, b1_ref, w2_ref, b2_ref).astype(on_ref.dtype)


def _param_specs():
    # Whole-array, single-buffered VMEM residency for the (tiny) weights/biases.
    vmem = pltpu.MemorySpace.VMEM
    return [pl.BlockSpec(memory_space=vmem) for _ in range(4)]


def prepare_params(w1, b1, w2, b2, dtype=jnp.bfloat16):
    """Cast/reshape the parameters ONCE (outside the per-call wrapper).

    w1: (D, H) pre-transposed fc1 weight (H = 2*D), b1: (H,)
    w2: (H, D) pre-transposed fc2 weight,           b2: (D,)
    Returns (w1, b1(1,H), w2, b2(1,D)) in `dtype`.
    """
    return (w1.astype(dtype), b1.reshape(1, -1).astype(dtype),
            w2.astype(dtype), b2.reshape(1, -1).astype(dtype))


def triplet_embedding_net(x, params, *, block_rows=1024, out_dtype=None):
    """Single-branch forward (PyTorch get_embedding / forward equivalent)."""
    w1, b1, w2, b2 = params
    B, D = x.shape
    H = w1.shape[1]
    assert w1.shape == (D, H) and w2.shape == (H, D)
    assert b1.shape == (1, H) and b2.shape == (1, D)

    out_dtype = out_dtype or x.dtype
    if x.dtype != w1.dtype:
        x = x.astype(w1.dtype)          # skipped if caller already provides bf16

    tm, grid = _pick_tile(B, block_rows)
    x_spec = pl.BlockSpec((tm, D), lambda i: (i, 0))

    param_bytes = sum(int(p.size) * p.dtype.itemsize for p in (w1, b1, w2, b2))
    cost = pl.CostEstimate(
        flops=4 * B * D * H,
        transcendentals=0,
        bytes_accessed=int(x.size) * x.dtype.itemsize + param_bytes
        + B * D * jnp.dtype(out_dtype).itemsize,
    )

    return pl.pallas_call(
        _embed_kernel,
        out_shape=jax.ShapeDtypeStruct((B, D), out_dtype),
        grid=(grid,),
        in_specs=[x_spec] + _param_specs(),
        out_specs=pl.BlockSpec((tm, D), lambda i: (i, 0)),
        compiler_params=pltpu.CompilerParams(
            dimension_semantics=("parallel",),   # shards batch tiles across TCs (v7x)
        ),
        cost_estimate=cost,
    )(x, w1, b1, w2, b2)


def triplet_forward(anchor, positive, negative, params, *, block_rows=1024,
                    out_dtype=None):
    """Fused triplet forward: one pallas_call, three inputs / three outputs,
    shared weights DMA'd into VMEM once. No HBM concat/pad passes."""
    w1, b1, w2, b2 = params
    B, D = anchor.shape
    assert positive.shape == (B, D) and negative.shape == (B, D)
    H = w1.shape[1]
    assert w1.shape == (D, H) and w2.shape == (H, D)
    assert b1.shape == (1, H) and b2.shape == (1, D)

    out_dtype = out_dtype or anchor.dtype
    cast = lambda a: a if a.dtype == w1.dtype else a.astype(w1.dtype)
    anchor, positive, negative = cast(anchor), cast(positive), cast(negative)

    tm, grid = _pick_tile(B, block_rows)
    x_spec = pl.BlockSpec((tm, D), lambda i: (i, 0))
    o_spec = pl.BlockSpec((tm, D), lambda i: (i, 0))
    o_sds = jax.ShapeDtypeStruct((B, D), out_dtype)

    in_bytes = 3 * B * D * anchor.dtype.itemsize
    param_bytes = sum(int(p.size) * p.dtype.itemsize for p in (w1, b1, w2, b2))
    out_bytes = 3 * B * D * jnp.dtype(out_dtype).itemsize
    cost = pl.CostEstimate(
        flops=3 * 4 * B * D * H,
        transcendentals=0,
        bytes_accessed=in_bytes + param_bytes + out_bytes,
    )

    return pl.pallas_call(
        _triplet_kernel,
        out_shape=(o_sds, o_sds, o_sds),
        grid=(grid,),
        in_specs=[x_spec, x_spec, x_spec] + _param_specs(),
        out_specs=(o_spec, o_spec, o_spec),
        compiler_params=pltpu.CompilerParams(
            dimension_semantics=("parallel",),
        ),
        cost_estimate=cost,
    )(anchor, positive, negative, w1, b1, w2, b2)


def _reference(x, w1, b1, w2, b2):
    h = jnp.maximum(x @ w1 + b1, 0.0)
    y = jnp.maximum(h @ w2 + b2, 0.0)
    return y


if __name__ == "__main__":
    dim = 16
    batch = 8

    key = jax.random.PRNGKey(0)
    ka, kp, kn, kw1, kb1, kw2, kb2 = jax.random.split(key, 7)

    # PyTorch Linear shapes fc1: (2D, D), fc2: (D, 2D); stored pre-transposed (in, out).
    bound1 = 1.0 / jnp.sqrt(dim)
    bound2 = 1.0 / jnp.sqrt(2 * dim)
    w1 = jax.random.uniform(kw1, (dim, 2 * dim), jnp.float32, -bound1, bound1)
    b1 = jax.random.uniform(kb1, (2 * dim,), jnp.float32, -bound1, bound1)
    w2 = jax.random.uniform(kw2, (2 * dim, dim), jnp.float32, -bound2, bound2)
    b2 = jax.random.uniform(kb2, (dim,), jnp.float32, -bound2, bound2)

    anchor = jax.random.normal(ka, (batch, dim), jnp.float32)
    positive = jax.random.normal(kp, (batch, dim), jnp.float32)
    negative = jax.random.normal(kn, (batch, dim), jnp.float32)

    ref_a = _reference(anchor, w1, b1, w2, b2)
    ref_p = _reference(positive, w1, b1, w2, b2)
    ref_n = _reference(negative, w1, b1, w2, b2)

    # --- bf16 I/O + f32 MXU accumulation (default fast path), params cast once ---
    params_bf16 = prepare_params(w1, b1, w2, b2, jnp.bfloat16)
    out_a, out_p, out_n = jax.block_until_ready(
        triplet_forward(anchor, positive, negative, params_bf16))
    assert out_a.shape == (batch, dim) and out_a.dtype == anchor.dtype
    for got, ref, name in ((out_a, ref_a, "anchor"),
                           (out_p, ref_p, "positive"),
                           (out_n, ref_n, "negative")):
        assert jnp.allclose(got, ref, atol=5e-2, rtol=5e-2), f"{name} mismatch (bf16)"

    # --- f32 path with tight tolerance (proves exact kernel structure), plus the
    #     single-branch get_embedding equivalent ---
    params_f32 = prepare_params(w1, b1, w2, b2, jnp.float32)
    emb = jax.block_until_ready(triplet_embedding_net(anchor, params_f32))
    assert jnp.allclose(emb, ref_a, atol=1e-5, rtol=1e-5), "embedding mismatch (f32)"

    # --- exercise a multi-step parallel grid with a masked (partial) tail tile ---
    big_batch = 40
    xb = jax.random.normal(jax.random.PRNGKey(1), (big_batch, dim), jnp.float32)
    emb_big = jax.block_until_ready(triplet_embedding_net(xb, params_f32))
    assert emb_big.shape == (big_batch, dim)
    assert jnp.allclose(emb_big, _reference(xb, w1, b1, w2, b2),
                        atol=1e-5, rtol=1e-5), "big-batch mismatch (f32)"

    print("KERNEL_OK")
</pallas_src>

<mosaic_0001>
module attributes {stable_mosaic.version = 11 : i64} {
  func.func @_triplet_kernel(%arg0: i32, %arg1: memref<8x16xbf16, #tpu.memory_space<vmem>>, %arg2: memref<8x16xbf16, #tpu.memory_space<vmem>>, %arg3: memref<8x16xbf16, #tpu.memory_space<vmem>>, %arg4: memref<16x32xbf16, #tpu.memory_space<vmem>>, %arg5: memref<1x32xbf16, #tpu.memory_space<vmem>>, %arg6: memref<32x16xbf16, #tpu.memory_space<vmem>>, %arg7: memref<1x16xbf16, #tpu.memory_space<vmem>>, %arg8: memref<8x16xf32, #tpu.memory_space<vmem>>, %arg9: memref<8x16xf32, #tpu.memory_space<vmem>>, %arg10: memref<8x16xf32, #tpu.memory_space<vmem>>) attributes {dimension_semantics = [#tpu.dimension_semantics<parallel>], iteration_bounds = array<i64: 1>, scalar_prefetch = 0 : i64, scratch_operands = 0 : i64, tpu.core_type = #tpu.core_type<tc>, window_params = [{transform_indices = @transform_0, window_bounds = array<i64: 8, 16>}, {transform_indices = @transform_1, window_bounds = array<i64: 8, 16>}, {transform_indices = @transform_2, window_bounds = array<i64: 8, 16>}, {pipeline_mode = #tpu.pipeline_mode<synchronous>, transform_indices = @transform_3, window_bounds = array<i64: 16, 32>}, {pipeline_mode = #tpu.pipeline_mode<synchronous>, transform_indices = @transform_4, window_bounds = array<i64: 1, 32>}, {pipeline_mode = #tpu.pipeline_mode<synchronous>, transform_indices = @transform_5, window_bounds = array<i64: 32, 16>}, {pipeline_mode = #tpu.pipeline_mode<synchronous>, transform_indices = @transform_6, window_bounds = array<i64: 1, 16>}, {transform_indices = @transform_7, window_bounds = array<i64: 8, 16>}, {transform_indices = @transform_8, window_bounds = array<i64: 8, 16>}, {transform_indices = @transform_9, window_bounds = array<i64: 8, 16>}]} {
    %c0 = arith.constant 0 : index
    %c0_0 = arith.constant 0 : index
    %0 = vector.load %arg1[%c0, %c0_0] : memref<8x16xbf16, #tpu.memory_space<vmem>>, vector<8x16xbf16>
    %c0_1 = arith.constant 0 : index
    %c0_2 = arith.constant 0 : index
    %1 = vector.load %arg4[%c0_1, %c0_2] : memref<16x32xbf16, #tpu.memory_space<vmem>>, vector<16x32xbf16>
    %cst = arith.constant dense<0.000000e+00> : vector<8x32xf32>
    %2 = tpu.matmul %0, %1, %cst {dimension_numbers = #tpu.dot_dimension_numbers<[1], [0], [0], [1], [0, 0, 1, 1], [], []>} : vector<8x16xbf16>, vector<16x32xbf16>, vector<8x32xf32> -> vector<8x32xf32>
    %c0_3 = arith.constant 0 : index
    %c0_4 = arith.constant 0 : index
    %3 = vector.load %arg5[%c0_3, %c0_4] : memref<1x32xbf16, #tpu.memory_space<vmem>>, vector<1x32xbf16>
    %4 = arith.extf %3 : vector<1x32xbf16> to vector<1x32xf32>
    %5 = vector.broadcast %4 : vector<1x32xf32> to vector<8x32xf32>
    %6 = arith.addf %2, %5 : vector<8x32xf32>
    %cst_5 = arith.constant 0.000000e+00 : f32
    %7 = vector.broadcast %cst_5 : f32 to vector<8x32xf32>
    %8 = arith.maximumf %6, %7 : vector<8x32xf32>
    %9 = arith.truncf %8 : vector<8x32xf32> to vector<8x32xbf16>
    %c0_6 = arith.constant 0 : index
    %c0_7 = arith.constant 0 : index
    %10 = vector.load %arg6[%c0_6, %c0_7] : memref<32x16xbf16, #tpu.memory_space<vmem>>, vector<32x16xbf16>
    %cst_8 = arith.constant dense<0.000000e+00> : vector<8x16xf32>
    %11 = tpu.matmul %9, %10, %cst_8 {dimension_numbers = #tpu.dot_dimension_numbers<[1], [0], [0], [1], [0, 0, 1, 1], [], []>} : vector<8x32xbf16>, vector<32x16xbf16>, vector<8x16xf32> -> vector<8x16xf32>
    %c0_9 = arith.constant 0 : index
    %c0_10 = arith.constant 0 : index
    %12 = vector.load %arg7[%c0_9, %c0_10] : memref<1x16xbf16, #tpu.memory_space<vmem>>, vector<1x16xbf16>
    %13 = arith.extf %12 : vector<1x16xbf16> to vector<1x16xf32>
    %14 = vector.broadcast %13 : vector<1x16xf32> to vector<8x16xf32>
    %15 = arith.addf %11, %14 : vector<8x16xf32>
    %cst_11 = arith.constant 0.000000e+00 : f32
    %16 = vector.broadcast %cst_11 : f32 to vector<8x16xf32>
    %17 = arith.maximumf %15, %16 : vector<8x16xf32>
    %c0_12 = arith.constant 0 : index
    %c0_13 = arith.constant 0 : index
    %18 = vector.load %arg8[%c0_12, %c0_13] : memref<8x16xf32, #tpu.memory_space<vmem>>, vector<8x16xf32>
    tpu.vector_store %arg8[%c0_12, %c0_13], %17 {strides = array<i32>} : memref<8x16xf32, #tpu.memory_space<vmem>>, vector<8x16xf32>,
    %c0_14 = arith.constant 0 : index
    %c0_15 = arith.constant 0 : index
    %19 = vector.load %arg2[%c0_14, %c0_15] : memref<8x16xbf16, #tpu.memory_space<vmem>>, vector<8x16xbf16>
    %c0_16 = arith.constant 0 : index
    %c0_17 = arith.constant 0 : index
    %20 = vector.load %arg4[%c0_16, %c0_17] : memref<16x32xbf16, #tpu.memory_space<vmem>>, vector<16x32xbf16>
    %cst_18 = arith.constant dense<0.000000e+00> : vector<8x32xf32>
    %21 = tpu.matmul %19, %20, %cst_18 {dimension_numbers = #tpu.dot_dimension_numbers<[1], [0], [0], [1], [0, 0, 1, 1], [], []>} : vector<8x16xbf16>, vector<16x32xbf16>, vector<8x32xf32> -> vector<8x32xf32>
    %c0_19 = arith.constant 0 : index
    %c0_20 = arith.constant 0 : index
    %22 = vector.load %arg5[%c0_19, %c0_20] : memref<1x32xbf16, #tpu.memory_space<vmem>>, vector<1x32xbf16>
    %23 = arith.extf %22 : vector<1x32xbf16> to vector<1x32xf32>
    %24 = vector.broadcast %23 : vector<1x32xf32> to vector<8x32xf32>
    %25 = arith.addf %21, %24 : vector<8x32xf32>
    %cst_21 = arith.constant 0.000000e+00 : f32
    %26 = vector.broadcast %cst_21 : f32 to vector<8x32xf32>
    %27 = arith.maximumf %25, %26 : vector<8x32xf32>
    %28 = arith.truncf %27 : vector<8x32xf32> to vector<8x32xbf16>
    %c0_22 = arith.constant 0 : index
    %c0_23 = arith.constant 0 : index
    %29 = vector.load %arg6[%c0_22, %c0_23] : memref<32x16xbf16, #tpu.memory_space<vmem>>, vector<32x16xbf16>
    %cst_24 = arith.constant dense<0.000000e+00> : vector<8x16xf32>
    %30 = tpu.matmul %28, %29, %cst_24 {dimension_numbers = #tpu.dot_dimension_numbers<[1], [0], [0], [1], [0, 0, 1, 1], [], []>} : vector<8x32xbf16>, vector<32x16xbf16>, vector<8x16xf32> -> vector<8x16xf32>
    %c0_25 = arith.constant 0 : index
    %c0_26 = arith.constant 0 : index
    %31 = vector.load %arg7[%c0_25, %c0_26] : memref<1x16xbf16, #tpu.memory_space<vmem>>, vector<1x16xbf16>
    %32 = arith.extf %31 : vector<1x16xbf16> to vector<1x16xf32>
    %33 = vector.broadcast %32 : vector<1x16xf32> to vector<8x16xf32>
    %34 = arith.addf %30, %33 : vector<8x16xf32>
    %cst_27 = arith.constant 0.000000e+00 : f32
    %35 = vector.broadcast %cst_27 : f32 to vector<8x16xf32>
    %36 = arith.maximumf %34, %35 : vector<8x16xf32>
    %c0_28 = arith.constant 0 : index
    %c0_29 = arith.constant 0 : index
    %37 = vector.load %arg9[%c0_28, %c0_29] : memref<8x16xf32, #tpu.memory_space<vmem>>, vector<8x16xf32>
    tpu.vector_store %arg9[%c0_28, %c0_29], %36 {strides = array<i32>} : memref<8x16xf32, #tpu.memory_space<vmem>>, vector<8x16xf32>,
    %c0_30 = arith.constant 0 : index
    %c0_31 = arith.constant 0 : index
    %38 = vector.load %arg3[%c0_30, %c0_31] : memref<8x16xbf16, #tpu.memory_space<vmem>>, vector<8x16xbf16>
    %c0_32 = arith.constant 0 : index
    %c0_33 = arith.constant 0 : index
    %39 = vector.load %arg4[%c0_32, %c0_33] : memref<16x32xbf16, #tpu.memory_space<vmem>>, vector<16x32xbf16>
    %cst_34 = arith.constant dense<0.000000e+00> : vector<8x32xf32>
    %40 = tpu.matmul %38, %39, %cst_34 {dimension_numbers = #tpu.dot_dimension_numbers<[1], [0], [0], [1], [0, 0, 1, 1], [], []>} : vector<8x16xbf16>, vector<16x32xbf16>, vector<8x32xf32> -> vector<8x32xf32>
    %c0_35 = arith.constant 0 : index
    %c0_36 = arith.constant 0 : index
    %41 = vector.load %arg5[%c0_35, %c0_36] : memref<1x32xbf16, #tpu.memory_space<vmem>>, vector<1x32xbf16>
    %42 = arith.extf %41 : vector<1x32xbf16> to vector<1x32xf32>
    %43 = vector.broadcast %42 : vector<1x32xf32> to vector<8x32xf32>
    %44 = arith.addf %40, %43 : vector<8x32xf32>
    %cst_37 = arith.constant 0.000000e+00 : f32
    %45 = vector.broadcast %cst_37 : f32 to vector<8x32xf32>
    %46 = arith.maximumf %44, %45 : vector<8x32xf32>
    %47 = arith.truncf %46 : vector<8x32xf32> to vector<8x32xbf16>
    %c0_38 = arith.constant 0 : index
    %c0_39 = arith.constant 0 : index
    %48 = vector.load %arg6[%c0_38, %c0_39] : memref<32x16xbf16, #tpu.memory_space<vmem>>, vector<32x16xbf16>
    %cst_40 = arith.constant dense<0.000000e+00> : vector<8x16xf32>
    %49 = tpu.matmul %47, %48, %cst_40 {dimension_numbers = #tpu.dot_dimension_numbers<[1], [0], [0], [1], [0, 0, 1, 1], [], []>} : vector<8x32xbf16>, vector<32x16xbf16>, vector<8x16xf32> -> vector<8x16xf32>
    %c0_41 = arith.constant 0 : index
    %c0_42 = arith.constant 0 : index
    %50 = vector.load %arg7[%c0_41, %c0_42] : memref<1x16xbf16, #tpu.memory_space<vmem>>, vector<1x16xbf16>
    %51 = arith.extf %50 : vector<1x16xbf16> to vector<1x16xf32>
    %52 = vector.broadcast %51 : vector<1x16xf32> to vector<8x16xf32>
    %53 = arith.addf %49, %52 : vector<8x16xf32>
    %cst_43 = arith.constant 0.000000e+00 : f32
    %54 = vector.broadcast %cst_43 : f32 to vector<8x16xf32>
    %55 = arith.maximumf %53, %54 : vector<8x16xf32>
    %c0_44 = arith.constant 0 : index
    %c0_45 = arith.constant 0 : index
    %56 = vector.load %arg10[%c0_44, %c0_45] : memref<8x16xf32, #tpu.memory_space<vmem>>, vector<8x16xf32>
    tpu.vector_store %arg10[%c0_44, %c0_45], %55 {strides = array<i32>} : memref<8x16xf32, #tpu.memory_space<vmem>>, vector<8x16xf32>,
    return
  }
  func.func @transform_0(%arg0: i32) -> (i32, i32) {
    %c0_i32 = arith.constant 0 : i32
    %c0_i32_0 = arith.constant 0 : i32
    return %arg0, %c0_i32 : i32, i32
  }
  func.func @transform_1(%arg0: i32) -> (i32, i32) {
    %c0_i32 = arith.constant 0 : i32
    %c0_i32_0 = arith.constant 0 : i32
    return %arg0, %c0_i32 : i32, i32
  }
  func.func @transform_2(%arg0: i32) -> (i32, i32) {
    %c0_i32 = arith.constant 0 : i32
    %c0_i32_0 = arith.constant 0 : i32
    return %arg0, %c0_i32 : i32, i32
  }
  func.func @transform_3(%arg0: i32) -> (i32, i32) {
    %c0_i32 = arith.constant 0 : i32
    %c0_i32_0 = arith.constant 0 : i32
    %c0_i32_1 = arith.constant 0 : i32
    return %c0_i32, %c0_i32_0 : i32, i32
  }
  func.func @transform_4(%arg0: i32) -> (i32, i32) {
    %c0_i32 = arith.constant 0 : i32
    %c0_i32_0 = arith.constant 0 : i32
    %c0_i32_1 = arith.constant 0 : i32
    return %c0_i32, %c0_i32_0 : i32, i32
  }
  func.func @transform_5(%arg0: i32) -> (i32, i32) {
    %c0_i32 = arith.constant 0 : i32
    %c0_i32_0 = arith.constant 0 : i32
    %c0_i32_1 = arith.constant 0 : i32
    return %c0_i32, %c0_i32_0 : i32, i32
  }
  func.func @transform_6(%arg0: i32) -> (i32, i32) {
    %c0_i32 = arith.constant 0 : i32
    %c0_i32_0 = arith.constant 0 : i32
    %c0_i32_1 = arith.constant 0 : i32
    return %c0_i32, %c0_i32_0 : i32, i32
  }
  func.func @transform_7(%arg0: i32) -> (i32, i32) {
    %c0_i32 = arith.constant 0 : i32
    %c0_i32_0 = arith.constant 0 : i32
    return %arg0, %c0_i32 : i32, i32
  }
  func.func @transform_8(%arg0: i32) -> (i32, i32) {
    %c0_i32 = arith.constant 0 : i32
    %c0_i32_0 = arith.constant 0 : i32
    return %arg0, %c0_i32 : i32, i32
  }
  func.func @transform_9(%arg0: i32) -> (i32, i32) {
    %c0_i32 = arith.constant 0 : i32
    %c0_i32_0 = arith.constant 0 : i32
    return %arg0, %c0_i32 : i32, i32
  }
}

</mosaic_0001>

<llo_original>
// kernel: tpu_custom_call.1
$region0: #{tpu_custom_call.1}
  #allocation0 [shape = 'u32[]', space=smem, size = 0x4, offset = 0x4, fixed_abs, tag = 'smem constant byte address 0x4 - core index']
  #allocation1 [shape = 'u32[144,128]{1,0:T(1,128)}', space=vmem, size = 0x12000, scoped, tag = 'internal scratch']
  %s0 = inlined_call_operand.vmem [shape: bf16[8,16], index: 0, kind: input, shape index: {}]
  %s1 = inlined_call_operand.vmem [shape: bf16[8,16], index: 1, kind: input, shape index: {}]
  %s2 = inlined_call_operand.vmem [shape: bf16[8,16], index: 2, kind: input, shape index: {}]
  %s3 = inlined_call_operand.vmem [shape: bf16[16,32], index: 3, kind: input, shape index: {}]
  %s4 = inlined_call_operand.vmem [shape: bf16[1,32], index: 4, kind: input, shape index: {}]
  %s5 = inlined_call_operand.vmem [shape: bf16[32,16], index: 5, kind: input, shape index: {}]
  %s6 = inlined_call_operand.vmem [shape: bf16[1,16], index: 6, kind: input, shape index: {}]
  %s7 = inlined_call_operand.hbm [shape: f32[8,16], index: 7, kind: output, shape index: {0}]
  %s8 = inlined_call_operand.hbm [shape: f32[8,16], index: 8, kind: output, shape index: {1}]
  %s9 = inlined_call_operand.hbm [shape: f32[8,16], index: 9, kind: output, shape index: {2}]
  %10 = xla_tuple %s7, %s8, %s9
  %s11 = sld [smem:[#allocation0]]
  $region54: #{tpu_custom_call.1} parent=0
    _
  %s13 = ssub.s32 1, %s11
  %s14 = scalar_select 0, %s13, %s11
  $region1: #{tpu_custom_call.1} parent=0
    #allocation2 [shape = 'u8[4096]{0}', space=vmem, size = 0x1000, scoped, tag = 'output window, operand 0, single buffered']
    #allocation3 [shape = 's32[1]{0}', space=sflag, size = 0x4, scoped, tag = 'scoped memory for tpu_custom_call.1']
    #allocation4 [shape = 'u8[4096]{0}', space=vmem, size = 0x1000, scoped, tag = 'output window, operand 1, single buffered']
    #allocation5 [shape = 's32[1]{0}', space=sflag, size = 0x4, scoped, tag = 'scoped memory for tpu_custom_call.1']
    #allocation6 [shape = 'u8[4096]{0}', space=vmem, size = 0x1000, scoped, tag = 'output window, operand 2, single buffered']
    %15 = vsyncpa [#allocation3], 0
    %16 = vsyncpa [#allocation5], 0
    // Predicated region
    $region2: #{tpu_custom_call.1} parent=1 // pred_check
      _
    $region3: #{tpu_custom_call.1} parent=1 // pred_check_branch
      %18 = sbr.rel (0) target = $region5
    $region4: #{tpu_custom_call.1} parent=1 // pred_region
      _
    $region5: #{tpu_custom_call.1} parent=1 // pred_fallthru
      _
    // Predicated region
    $region6: #{tpu_custom_call.1} parent=1 // pred_check
      _
    $region7: #{tpu_custom_call.1} parent=1 // pred_check_branch
      %20 = sbr.rel (0) target = $region9
    $region8: #{tpu_custom_call.1} parent=1 // pred_region
      _
    $region9: #{tpu_custom_call.1} parent=1 // pred_fallthru
      _
    // Predicated region
    $region10: #{tpu_custom_call.1} parent=1 // pred_check
      _
    $region11: #{tpu_custom_call.1} parent=1 // pred_check_branch
      %22 = sbr.rel (0) target = $region13
    $region12: #{tpu_custom_call.1} parent=1 // pred_region
      _
    $region13: #{tpu_custom_call.1} parent=1 // pred_fallthru
      _
    // Predicated region
    $region14: #{tpu_custom_call.1} parent=1 // pred_check
      _
    $region15: #{tpu_custom_call.1} parent=1 // pred_check_branch
      %24 = sbr.rel (0) target = $region17
    $region16: #{tpu_custom_call.1} parent=1 // pred_region
      _
    $region17: #{tpu_custom_call.1} parent=1 // pred_fallthru
      _
    // Predicated region
    $region18: #{tpu_custom_call.1} parent=1 // pred_check
      _
    $region19: #{tpu_custom_call.1} parent=1 // pred_check_branch
      %26 = sbr.rel (0) target = $region21
    $region20: #{tpu_custom_call.1} parent=1 // pred_region
      _
    $region21: #{tpu_custom_call.1} parent=1 // pred_fallthru
      _
    // Predicated region
    $region22: #{tpu_custom_call.1} parent=1 // pred_check
      _
    $region23: #{tpu_custom_call.1} parent=1 // pred_check_branch
      %28 = sbr.rel (0) target = $region25
    $region24: #{tpu_custom_call.1} parent=1 // pred_region
      _
    $region25: #{tpu_custom_call.1} parent=1 // pred_fallthru
      _
    // Predicated region
    $region26: #{tpu_custom_call.1} parent=1 // pred_check
      _
    $region27: #{tpu_custom_call.1} parent=1 // pred_check_branch
      %30 = sbr.rel (0) target = $region29
    $region28: #{tpu_custom_call.1} parent=1 // pred_region
      _
    $region29: #{tpu_custom_call.1} parent=1 // pred_fallthru
      _
    %v32 = vld [vmem:[%s0] sm:$0xf]
    %v33 = vld [vmem:[%s3] sm:$0xf]
    %v34 = vld [vmem:[%s3 + $0x4] sm:$0xf]
    %v35 = vld [vmem:[%s4] sm:$0x1]
    %v36 = vunpack.c.l.bf16 %v35
    %v37 = vlaneseq
    %v38 = vshrl.u32 %v37, 7
    %v39 = vsub.s32 0, %v38
    %v40 = vrot.slane %v36, %v39
    %v43 = vunpack.c.l.b16 %v33
    %v44 = vunpack.c.l.b16 %v34
    %v45 = vpack.c.b16 %v44, %v43
    %vm47 = vcmask 130048
    %v49 = vsel %vm47, %v32, 0
    %51 = vmatprep.subr.bf16.mxu0 0
    %52 = vmatpush1.bf16.msra.mxu0 0
    %53 = vmatprep.subr.bf16.mxu0 0
    %54 = vmatpush1.bf16.msra.mxu0 0
    %55 = vmatprep.subr.bf16.mxu0 0
    %56 = vmatpush1.bf16.msra.mxu0 0
    %57 = vmatprep.subr.bf16.mxu0 0
    %58 = vmatpush1.bf16.msra.mxu0 0
    %59 = vmatprep.subr.bf16.mxu0 0
    %60 = vmatpush1.bf16.msra.mxu0 0
    %61 = vmatprep.subr.bf16.mxu0 0
    %62 = vmatpush1.bf16.msra.mxu0 0
    %63 = vmatprep.subr.bf16.mxu0 0
    %64 = vmatpush1.bf16.msra.mxu0 0
    %65 = vmatprep.subr.bf16.mxu0 0
    %66 = vmatpush1.bf16.msra.mxu0 %v45
    %67 = vmatprep.subr.bf16.mxu0 0
    %68 = vmatpush2.bf16.msra.mxu0 0
    %69 = vmatprep.subr.bf16.mxu0 0
    %70 = vmatpush2.bf16.msra.mxu0 0
    %71 = vmatprep.subr.bf16.mxu0 0
    %72 = vmatpush2.bf16.msra.mxu0 0
    %73 = vmatprep.subr.bf16.mxu0 0
    %74 = vmatpush2.bf16.msra.mxu0 0
    %75 = vmatprep.subr.bf16.mxu0 0
    %76 = vmatpush2.bf16.msra.mxu0 0
    %77 = vmatprep.subr.bf16.mxu0 0
    %78 = vmatpush2.bf16.msra.mxu0 0
    %79 = vmatprep.subr.bf16.mxu0 0
    %80 = vmatpush2.bf16.msra.mxu0 0
    %81 = vmatprep.subr.bf16.mxu0 0
    %82 = vmatpush2.bf16.msra.mxu0 0
    %83 = vmatprep.mubr.bf16.mxu0 0
    %84 = vmatmul.mubr.bf16.gmra.mxu0 %v49
    %v85 = vpop.f32.mrf.mxu0
    %v86 = vadd.f32 %v40, %v85
    %v87 = vpop.f32.mrf.mxu0
    %v88 = vpop.f32.mrf.mxu0
    %v89 = vpop.f32.mrf.mxu0
    %90 = vdwg.mxu0
    %v91 = vmax.f32 %v86, 0.0
    %v92 = vpack.c.bf16 %v91, %v91
    %v93 = vld [vmem:[%s5] sm:$0xf]
    %v94 = vld [vmem:[%s5 + $0x4] sm:$0xf]
    %v95 = vld [vmem:[%s5 + $0x8] sm:$0xf]
    %v96 = vld [vmem:[%s5 + $0xc] sm:$0xf]
    %v97 = vld [vmem:[%s6] sm:$0x1]
    %v98 = vunpack.c.l.bf16 %v97
    %v99 = vlaneseq
    %v100 = vshrl.u32 %v99, 7
    %v101 = vsub.s32 0, %v100
    %v102 = vrot.slane %v98, %v101
    %v107 = vunpack.c.l.b16 %v93
    %v108 = vunpack.c.l.b16 %v94
    %v109 = vunpack.c.l.b16 %v95
    %v110 = vunpack.c.l.b16 %v96
    %v111 = vpack.c.b16 %v108, %v107
    %v112 = vpack.c.b16 %v110, %v109
    %vm115 = vcmask 261120
    %v117 = vsel %vm115, %v92, 0
    %119 = vmatprep.subr.bf16.mxu0 0
    %120 = vmatpush1.bf16.msra.mxu0 0
    %121 = vmatprep.subr.bf16.mxu0 0
    %122 = vmatpush1.bf16.msra.mxu0 0
    %123 = vmatprep.subr.bf16.mxu0 0
    %124 = vmatpush1.bf16.msra.mxu0 0
    %125 = vmatprep.subr.bf16.mxu0 0
    %126 = vmatpush1.bf16.msra.mxu0 0
    %127 = vmatprep.subr.bf16.mxu0 0
    %128 = vmatpush1.bf16.msra.mxu0 0
    %129 = vmatprep.subr.bf16.mxu0 0
    %130 = vmatpush1.bf16.msra.mxu0 0
    %131 = vmatprep.subr.bf16.mxu0 0
    %132 = vmatpush1.bf16.msra.mxu0 %v112
    %133 = vmatprep.subr.bf16.mxu0 0
    %134 = vmatpush1.bf16.msra.mxu0 %v111
    %135 = vmatprep.subr.bf16.mxu0 0
    %136 = vmatpush2.bf16.msra.mxu0 0
    %137 = vmatprep.subr.bf16.mxu0 0
    %138 = vmatpush2.bf16.msra.mxu0 0
    %139 = vmatprep.subr.bf16.mxu0 0
    %140 = vmatpush2.bf16.msra.mxu0 0
    %141 = vmatprep.subr.bf16.mxu0 0
    %142 = vmatpush2.bf16.msra.mxu0 0
    %143 = vmatprep.subr.bf16.mxu0 0
    %144 = vmatpush2.bf16.msra.mxu0 0
    %145 = vmatprep.subr.bf16.mxu0 0
    %146 = vmatpush2.bf16.msra.mxu0 0
    %147 = vmatprep.subr.bf16.mxu0 0
    %148 = vmatpush2.bf16.msra.mxu0 0
    %149 = vmatprep.subr.bf16.mxu0 0
    %150 = vmatpush2.bf16.msra.mxu0 0
    %151 = vmatprep.mubr.bf16.mxu0 0
    %152 = vmatmul.mubr.bf16.gmra.mxu0 %v117
    %v153 = vpop.f32.mrf.mxu0
    %v154 = vadd.f32 %v102, %v153
    %v155 = vpop.f32.mrf.mxu0
    %v156 = vpop.f32.mrf.mxu0
    %v157 = vpop.f32.mrf.mxu0
    %158 = vdwg.mxu0
    %v159 = vmax.f32 %v154, 0.0
    %160 = vst.msk [vmem:[#allocation2] sm:$0xff] %vm47, %v159
    %v161 = vld [vmem:[%s1] sm:$0xf]
    %v162 = vld [vmem:[%s3] sm:$0xf]
    %v163 = vld [vmem:[%s3 + $0x4] sm:$0xf]
    %v164 = vld [vmem:[%s4] sm:$0x1]
    %v165 = vunpack.c.l.bf16 %v164
    %v166 = vlaneseq
    %v167 = vshrl.u32 %v166, 7
    %v168 = vsub.s32 0, %v167
    %v169 = vrot.slane %v165, %v168
    %v172 = vunpack.c.l.b16 %v162
    %v173 = vunpack.c.l.b16 %v163
    %v174 = vpack.c.b16 %v173, %v172
    %v177 = vsel %vm47, %v161, 0
    %179 = vmatprep.subr.bf16.mxu0 0
    %180 = vmatpush1.bf16.msra.mxu0 0
    %181 = vmatprep.subr.bf16.mxu0 0
    %182 = vmatpush1.bf16.msra.mxu0 0
    %183 = vmatprep.subr.bf16.mxu0 0
    %184 = vmatpush1.bf16.msra.mxu0 0
    %185 = vmatprep.subr.bf16.mxu0 0
    %186 = vmatpush1.bf16.msra.mxu0 0
    %187 = vmatprep.subr.bf16.mxu0 0
    %188 = vmatpush1.bf16.msra.mxu0 0
    %189 = vmatprep.subr.bf16.mxu0 0
    %190 = vmatpush1.bf16.msra.mxu0 0
    %191 = vmatprep.subr.bf16.mxu0 0
    %192 = vmatpush1.bf16.msra.mxu0 0
    %193 = vmatprep.subr.bf16.mxu0 0
    %194 = vmatpush1.bf16.msra.mxu0 %v174
    %195 = vmatprep.subr.bf16.mxu0 0
    %196 = vmatpush2.bf16.msra.mxu0 0
    %197 = vmatprep.subr.bf16.mxu0 0
    %198 = vmatpush2.bf16.msra.mxu0 0
    %199 = vmatprep.subr.bf16.mxu0 0
    %200 = vmatpush2.bf16.msra.mxu0 0
    %201 = vmatprep.subr.bf16.mxu0 0
    %202 = vmatpush2.bf16.msra.mxu0 0
    %203 = vmatprep.subr.bf16.mxu0 0
    %204 = vmatpush2.bf16.msra.mxu0 0
    %205 = vmatprep.subr.bf16.mxu0 0
    %206 = vmatpush2.bf16.msra.mxu0 0
    %207 = vmatprep.subr.bf16.mxu0 0
    %208 = vmatpush2.bf16.msra.mxu0 0
    %209 = vmatprep.subr.bf16.mxu0 0
    %210 = vmatpush2.bf16.msra.mxu0 0
    %211 = vmatprep.mubr.bf16.mxu0 0
    %212 = vmatmul.mubr.bf16.gmra.mxu0 %v177
    %v213 = vpop.f32.mrf.mxu0
    %v214 = vadd.f32 %v169, %v213
    %v215 = vpop.f32.mrf.mxu0
    %v216 = vpop.f32.mrf.mxu0
    %v217 = vpop.f32.mrf.mxu0
    %218 = vdwg.mxu0
    %v219 = vmax.f32 %v214, 0.0
    %v220 = vpack.c.bf16 %v219, %v219
    %v221 = vld [vmem:[%s5] sm:$0xf]
    %v222 = vld [vmem:[%s5 + $0x4] sm:$0xf]
    %v223 = vld [vmem:[%s5 + $0x8] sm:$0xf]
    %v224 = vld [vmem:[%s5 + $0xc] sm:$0xf]
    %v225 = vld [vmem:[%s6] sm:$0x1]
    %v226 = vunpack.c.l.bf16 %v225
    %v227 = vlaneseq
    %v228 = vshrl.u32 %v227, 7
    %v229 = vsub.s32 0, %v228
    %v230 = vrot.slane %v226, %v229
    %v235 = vunpack.c.l.b16 %v221
    %v236 = vunpack.c.l.b16 %v222
    %v237 = vunpack.c.l.b16 %v223
    %v238 = vunpack.c.l.b16 %v224
    %v239 = vpack.c.b16 %v236, %v235
    %v240 = vpack.c.b16 %v238, %v237
    %v244 = vsel %vm115, %v220, 0
    %246 = vmatprep.subr.bf16.mxu0 0
    %247 = vmatpush1.bf16.msra.mxu0 0
    %248 = vmatprep.subr.bf16.mxu0 0
    %249 = vmatpush1.bf16.msra.mxu0 0
    %250 = vmatprep.subr.bf16.mxu0 0
    %251 = vmatpush1.bf16.msra.mxu0 0
    %252 = vmatprep.subr.bf16.mxu0 0
    %253 = vmatpush1.bf16.msra.mxu0 0
    %254 = vmatprep.subr.bf16.mxu0 0
    %255 = vmatpush1.bf16.msra.mxu0 0
    %256 = vmatprep.subr.bf16.mxu0 0
    %257 = vmatpush1.bf16.msra.mxu0 0
    %258 = vmatprep.subr.bf16.mxu0 0
    %259 = vmatpush1.bf16.msra.mxu0 %v240
    %260 = vmatprep.subr.bf16.mxu0 0
    %261 = vmatpush1.bf16.msra.mxu0 %v239
    %262 = vmatprep.subr.bf16.mxu0 0
    %263 = vmatpush2.bf16.msra.mxu0 0
    %264 = vmatprep.subr.bf16.mxu0 0
    %265 = vmatpush2.bf16.msra.mxu0 0
    %266 = vmatprep.subr.bf16.mxu0 0
    %267 = vmatpush2.bf16.msra.mxu0 0
    %268 = vmatprep.subr.bf16.mxu0 0
    %269 = vmatpush2.bf16.msra.mxu0 0
    %270 = vmatprep.subr.bf16.mxu0 0
    %271 = vmatpush2.bf16.msra.mxu0 0
    %272 = vmatprep.subr.bf16.mxu0 0
    %273 = vmatpush2.bf16.msra.mxu0 0
    %274 = vmatprep.subr.bf16.mxu0 0
    %275 = vmatpush2.bf16.msra.mxu0 0
    %276 = vmatprep.subr.bf16.mxu0 0
    %277 = vmatpush2.bf16.msra.mxu0 0
    %278 = vmatprep.mubr.bf16.mxu0 0
    %279 = vmatmul.mubr.bf16.gmra.mxu0 %v244
    %v280 = vpop.f32.mrf.mxu0
    %v281 = vadd.f32 %v230, %v280
    %v282 = vpop.f32.mrf.mxu0
    %v283 = vpop.f32.mrf.mxu0
    %v284 = vpop.f32.mrf.mxu0
    %285 = vdwg.mxu0
    %v286 = vmax.f32 %v281, 0.0
    %287 = vst.msk [vmem:[#allocation4] sm:$0xff] %vm47, %v286
    %v288 = vld [vmem:[%s2] sm:$0xf]
    %v289 = vld [vmem:[%s3] sm:$0xf]
    %v290 = vld [vmem:[%s3 + $0x4] sm:$0xf]
    %v291 = vld [vmem:[%s4] sm:$0x1]
    %v292 = vunpack.c.l.bf16 %v291
    %v293 = vlaneseq
    %v294 = vshrl.u32 %v293, 7
    %v295 = vsub.s32 0, %v294
    %v296 = vrot.slane %v292, %v295
    %v299 = vunpack.c.l.b16 %v289
    %v300 = vunpack.c.l.b16 %v290
    %v301 = vpack.c.b16 %v300, %v299
    %v304 = vsel %vm47, %v288, 0
    %306 = vmatprep.subr.bf16.mxu0 0
    %307 = vmatpush1.bf16.msra.mxu0 0
    %308 = vmatprep.subr.bf16.mxu0 0
    %309 = vmatpush1.bf16.msra.mxu0 0
    %310 = vmatprep.subr.bf16.mxu0 0
    %311 = vmatpush1.bf16.msra.mxu0 0
    %312 = vmatprep.subr.bf16.mxu0 0
    %313 = vmatpush1.bf16.msra.mxu0 0
    %314 = vmatprep.subr.bf16.mxu0 0
    %315 = vmatpush1.bf16.msra.mxu0 0
    %316 = vmatprep.subr.bf16.mxu0 0
    %317 = vmatpush1.bf16.msra.mxu0 0
    %318 = vmatprep.subr.bf16.mxu0 0
    %319 = vmatpush1.bf16.msra.mxu0 0
    %320 = vmatprep.subr.bf16.mxu0 0
    %321 = vmatpush1.bf16.msra.mxu0 %v301
    %322 = vmatprep.subr.bf16.mxu0 0
    %323 = vmatpush2.bf16.msra.mxu0 0
    %324 = vmatprep.subr.bf16.mxu0 0
    %325 = vmatpush2.bf16.msra.mxu0 0
    %326 = vmatprep.subr.bf16.mxu0 0
    %327 = vmatpush2.bf16.msra.mxu0 0
    %328 = vmatprep.subr.bf16.mxu0 0
    %329 = vmatpush2.bf16.msra.mxu0 0
    %330 = vmatprep.subr.bf16.mxu0 0
    %331 = vmatpush2.bf16.msra.mxu0 0
    %332 = vmatprep.subr.bf16.mxu0 0
    %333 = vmatpush2.bf16.msra.mxu0 0
    %334 = vmatprep.subr.bf16.mxu0 0
    %335 = vmatpush2.bf16.msra.mxu0 0
    %336 = vmatprep.subr.bf16.mxu0 0
    %337 = vmatpush2.bf16.msra.mxu0 0
    %338 = vmatprep.mubr.bf16.mxu0 0
    %339 = vmatmul.mubr.bf16.gmra.mxu0 %v304
    %v340 = vpop.f32.mrf.mxu0
    %v341 = vadd.f32 %v296, %v340
    %v342 = vpop.f32.mrf.mxu0
    %v343 = vpop.f32.mrf.mxu0
    %v344 = vpop.f32.mrf.mxu0
    %345 = vdwg.mxu0
    %v346 = vmax.f32 %v341, 0.0
    %v347 = vpack.c.bf16 %v346, %v346
    %v348 = vld [vmem:[%s5] sm:$0xf]
    %v349 = vld [vmem:[%s5 + $0x4] sm:$0xf]
    %v350 = vld [vmem:[%s5 + $0x8] sm:$0xf]
    %v351 = vld [vmem:[%s5 + $0xc] sm:$0xf]
    %v352 = vld [vmem:[%s6] sm:$0x1]
    %v353 = vunpack.c.l.bf16 %v352
    %v354 = vlaneseq
    %v355 = vshrl.u32 %v354, 7
    %v356 = vsub.s32 0, %v355
    %v357 = vrot.slane %v353, %v356
    %v362 = vunpack.c.l.b16 %v348
    %v363 = vunpack.c.l.b16 %v349
    %v364 = vunpack.c.l.b16 %v350
    %v365 = vunpack.c.l.b16 %v351
    %v366 = vpack.c.b16 %v363, %v362
    %v367 = vpack.c.b16 %v365, %v364
    %v371 = vsel %vm115, %v347, 0
    %373 = vmatprep.subr.bf16.mxu0 0
    %374 = vmatpush1.bf16.msra.mxu0 0
    %375 = vmatprep.subr.bf16.mxu0 0
    %376 = vmatpush1.bf16.msra.mxu0 0
    %377 = vmatprep.subr.bf16.mxu0 0
    %378 = vmatpush1.bf16.msra.mxu0 0
    %379 = vmatprep.subr.bf16.mxu0 0
    %380 = vmatpush1.bf16.msra.mxu0 0
    %381 = vmatprep.subr.bf16.mxu0 0
    %382 = vmatpush1.bf16.msra.mxu0 0
    %383 = vmatprep.subr.bf16.mxu0 0
    %384 = vmatpush1.bf16.msra.mxu0 0
    %385 = vmatprep.subr.bf16.mxu0 0
    %386 = vmatpush1.bf16.msra.mxu0 %v367
    %387 = vmatprep.subr.bf16.mxu0 0
    %388 = vmatpush1.bf16.msra.mxu0 %v366
    %389 = vmatprep.subr.bf16.mxu0 0
    %390 = vmatpush2.bf16.msra.mxu0 0
    %391 = vmatprep.subr.bf16.mxu0 0
    %392 = vmatpush2.bf16.msra.mxu0 0
    %393 = vmatprep.subr.bf16.mxu0 0
    %394 = vmatpush2.bf16.msra.mxu0 0
    %395 = vmatprep.subr.bf16.mxu0 0
    %396 = vmatpush2.bf16.msra.mxu0 0
    %397 = vmatprep.subr.bf16.mxu0 0
    %398 = vmatpush2.bf16.msra.mxu0 0
    %399 = vmatprep.subr.bf16.mxu0 0
    %400 = vmatpush2.bf16.msra.mxu0 0
    %401 = vmatprep.subr.bf16.mxu0 0
    %402 = vmatpush2.bf16.msra.mxu0 0
    %403 = vmatprep.subr.bf16.mxu0 0
    %404 = vmatpush2.bf16.msra.mxu0 0
    %405 = vmatprep.mubr.bf16.mxu0 0
    %406 = vmatmul.mubr.bf16.gmra.mxu0 %v371
    %v407 = vpop.f32.mrf.mxu0
    %v408 = vadd.f32 %v357, %v407
    %v409 = vpop.f32.mrf.mxu0
    %v410 = vpop.f32.mrf.mxu0
    %v411 = vpop.f32.mrf.mxu0
    %412 = vdwg.mxu0
    %v413 = vmax.f32 %v408, 0.0
    %414 = vst.msk [vmem:[#allocation6] sm:$0xff] %vm47, %v413
    // Predicated region
    $region30: #{tpu_custom_call.1} parent=1 // pred_check
      _
    $region31: #{tpu_custom_call.1} parent=1 // pred_check_branch
      %416 = sbr.rel (0) target = $region33
    $region32: #{tpu_custom_call.1} parent=1 // pred_region
      %s418 = ssub.s32 128, 128
      %419 = vsyncadd [#allocation3], %s418
      %s421 = sshll.u32 [#allocation2], 4
      %s422 = int_to_ptr.vmem [resolvable:$true] %s421
      %424 = dma.vmem_to_hbm [thread:$0]  %s422, 128, %s7, [#allocation3]
    $region33: #{tpu_custom_call.1} parent=1 // pred_fallthru
      _
    // Predicated region
    $region34: #{tpu_custom_call.1} parent=1 // pred_check
      _
    $region35: #{tpu_custom_call.1} parent=1 // pred_check_branch
      %426 = sbr.rel (0) target = $region37
    $region36: #{tpu_custom_call.1} parent=1 // pred_region
      %s428 = ssub.s32 128, 128
      %429 = vsyncadd [#allocation5], %s428
      %s431 = sshll.u32 [#allocation4], 4
      %s432 = int_to_ptr.vmem [resolvable:$true] %s431
      %434 = dma.vmem_to_hbm [thread:$0]  %s432, 128, %s8, [#allocation5]
    $region37: #{tpu_custom_call.1} parent=1 // pred_fallthru
      _
    // Predicated region
    $region38: #{tpu_custom_call.1} parent=1 // pred_check
      _
    $region39: #{tpu_custom_call.1} parent=1 // pred_check_branch
      %436 = sbr.rel (0) target = $region41
    $region40: #{tpu_custom_call.1} parent=1 // pred_region
      %s438 = ssub.s32 128, 128
      %439 = vsyncadd [#allocation5], %s438
      %s441 = sshll.u32 [#allocation6], 4
      %s442 = int_to_ptr.vmem [resolvable:$true] %s441
      %444 = dma.vmem_to_hbm [thread:$0]  %s442, 128, %s9, [#allocation5]
    $region41: #{tpu_custom_call.1} parent=1 // pred_fallthru
      _
    // Predicated region
    $region42: #{tpu_custom_call.1} parent=1 // pred_check
      _
    $region43: #{tpu_custom_call.1} parent=1 // pred_check_branch
      %446 = sbr.rel (0) target = $region45
    $region44: #{tpu_custom_call.1} parent=1 // pred_region
      %447 = dma.done [#allocation3], 128
    $region45: #{tpu_custom_call.1} parent=1 // pred_fallthru
      _
    // Predicated region
    $region46: #{tpu_custom_call.1} parent=1 // pred_check
      _
    $region47: #{tpu_custom_call.1} parent=1 // pred_check_branch
      %449 = sbr.rel (0) target = $region49
    $region48: #{tpu_custom_call.1} parent=1 // pred_region
      %450 = dma.done [#allocation5], 128
    $region49: #{tpu_custom_call.1} parent=1 // pred_fallthru
      _
    // Predicated region
    $region50: #{tpu_custom_call.1} parent=1 // pred_check
      _
    $region51: #{tpu_custom_call.1} parent=1 // pred_check_branch
      %452 = sbr.rel (0) target = $region53
    $region52: #{tpu_custom_call.1} parent=1 // pred_region
      %453 = dma.done [#allocation5], 128
    $region53: #{tpu_custom_call.1} parent=1 // pred_fallthru
      _
    %454 = vsyncpa [#allocation3], 1
    %455 = vsyncpa [#allocation5], 1

</llo_original>
